<compile_context>
chip_gen: v7x
topology: tpu7x:2x2x1
jax: 0.10.0
libtpu: 0.0.40
codegen_flags: <defaults>
</compile_context>

<pallas_src>
import jax
import jax.numpy as jnp
from jax.experimental import pallas as pl
from jax.experimental.pallas import tpu as pltpu

LANE = 128      # vreg lane width
SUBLANE = 8     # vreg sublane count (f32)


def _round_up(n, m):
    return ((n + m - 1) // m) * m


def _cdiv(a, b):
    return (a + b - 1) // b


def mlp_kernel(x_ref, w1_ref, b1_ref, w2_ref, b2_ref, w3_ref, b3_ref, o_ref):
    # bf16 operands -> full-rate MXU; f32 accumulation (preferred_element_type);
    # f32 bias + ReLU epilogue (v5e VPU has no bf16 ALU, so keep epilogue f32).
    x = x_ref[...].astype(jnp.bfloat16)
    h1 = jnp.dot(x, w1_ref[...], preferred_element_type=jnp.float32) + b1_ref[...]
    h1 = jnp.maximum(h1, 0.0)
    h2 = jnp.dot(h1.astype(jnp.bfloat16), w2_ref[...],
                 preferred_element_type=jnp.float32) + b2_ref[...]
    h2 = jnp.maximum(h2, 0.0)
    out = jnp.dot(h2.astype(jnp.bfloat16), w3_ref[...],
                  preferred_element_type=jnp.float32) + b3_ref[...]
    # Lane-dense (multiple-of-128-wide) unmasked store; padding sliced outside.
    o_ref[...] = out.astype(o_ref.dtype)


def init_params(key, input_size, hidden_size, no_classes):
    """Deterministic init mimicking PyTorch nn.Linear default:
    U(-1/sqrt(fan_in), 1/sqrt(fan_in)) for weight and bias.
    Weights stored (in_features, out_features), i.e. transposed vs torch."""
    def linear(k, fan_in, fan_out):
        kw, kb = jax.random.split(k)
        bound = 1.0 / jnp.sqrt(jnp.float32(fan_in))
        w = jax.random.uniform(kw, (fan_in, fan_out), jnp.float32, -bound, bound)
        b = jax.random.uniform(kb, (1, fan_out), jnp.float32, -bound, bound)
        return w, b

    k1, k2, k3 = jax.random.split(key, 3)
    w1, b1 = linear(k1, input_size, hidden_size)
    w2, b2 = linear(k2, hidden_size, hidden_size)
    w3, b3 = linear(k3, hidden_size, no_classes)
    return dict(w1=w1, b1=b1, w2=w2, b2=b2, w3=w3, b3=b3)


def pad_params_for_tpu(params, *, hidden_multiple=None):
    """Zero-pad hidden / logits dims to MXU-friendly multiples and store the
    weights as bf16 (biases stay f32 for the f32 epilogue).  Call ONCE; padded
    params are reused across calls.  The input-feature dim K is left unpadded
    (the kernel contracts over the full K directly).  Zero padding keeps the
    forward pass numerically identical (up to bf16 rounding of the operands)."""
    w1, b1 = params["w1"], params["b1"]
    w2, b2 = params["w2"], params["b2"]
    w3, b3 = params["w3"], params["b3"]
    K, H = w1.shape
    N = w3.shape[1]
    if hidden_multiple is None:
        # v6e's MXU is 2x256x256 -> 256-aligned hidden tiles when H is large.
        # 128 matches v5e's 4x128x128 (pass hidden_multiple=128 there if needed).
        hidden_multiple = 256 if H > 128 else 128
    Hp = _round_up(H, hidden_multiple)
    Np = _round_up(N, LANE)

    def padw(a, rows, cols):
        a = jnp.pad(a, ((0, rows - a.shape[0]), (0, cols - a.shape[1])))
        return a.astype(jnp.bfloat16)        # bf16 weights: full MXU rate, half DMA

    def padb(a, cols):
        return jnp.pad(a, ((0, 0), (0, cols - a.shape[1]))).astype(jnp.float32)

    return dict(
        w1=padw(w1, K, Hp), b1=padb(b1, Hp),
        w2=padw(w2, Hp, Hp), b2=padb(b2, Hp),
        w3=padw(w3, Hp, Np), b3=padb(b3, Np),
        input_size=K, hidden_size=H, no_classes=N,
    )


def neural_net_forward(x, pp, *, max_block_b=1024):
    """x: (B, inputSize).  pp: output of pad_params_for_tpu.  Returns (B, noClasses) f32."""
    w1, b1 = pp["w1"], pp["b1"]
    w2, b2 = pp["w2"], pp["b2"]
    w3, b3 = pp["w3"], pp["b3"]
    K, N = pp["input_size"], pp["no_classes"]
    Hp = w2.shape[0]
    Np = w3.shape[1]

    B = x.shape[0]
    assert x.shape[1] == K, "input feature dim mismatch"
    xf = x.astype(jnp.float32)       # no feature-dim pad; bf16 cast happens in-kernel

    # Balanced batch tiling: pick the number of tiles first, then size each tile
    # (multiple of 8 sublanes) so the last tile is nearly full instead of padding
    # the batch up by a whole max_block_b tile.
    Bp8 = _round_up(B, SUBLANE)
    if Bp8 <= max_block_b:
        num_tiles, TB = 1, Bp8
    else:
        num_tiles = _cdiv(Bp8, max_block_b)
        TB = _round_up(_cdiv(Bp8, num_tiles), SUBLANE)
    Bp = num_tiles * TB
    if Bp != B:
        # Padded rows produce garbage logits that are sliced off below.
        xf = jnp.pad(xf, ((0, Bp - B), (0, 0)))

    # Explicit scoped-VMEM budget (v5e default is only 16 MiB): resident weights
    # (single-buffered) + double-buffered x/out tiles + activation headroom, x2
    # margin, clamped to stay well inside v7x's 64 MiB physical VMEM.
    weight_bytes = sum(int(a.size) * a.dtype.itemsize
                       for a in (w1, b1, w2, b2, w3, b3))
    tile_bytes = 2 * TB * K * 4 + 2 * TB * Np * 4 + TB * Hp * 6 * 2
    vmem_limit = int(min(max(2 * (weight_bytes + tile_bytes), 32 << 20), 48 << 20))

    out_shape = jax.ShapeDtypeStruct((Bp, Np), jnp.float32)

    if num_tiles == 1:
        # Whole problem fits one tile: no grid, no pipeline bookkeeping — stage
        # full arrays straight into VMEM and run the fused body once.
        vmem = pl.BlockSpec(memory_space=pltpu.MemorySpace.VMEM)
        out_p = pl.pallas_call(
            mlp_kernel,
            out_shape=out_shape,
            in_specs=[vmem] * 7,
            out_specs=vmem,
            compiler_params=pltpu.CompilerParams(vmem_limit_bytes=vmem_limit),
        )(xf, w1, b1, w2, b2, w3, b3)
        return out_p[:B, :N]

    def resident(arr, single_buffer):
        # Constant index_map -> stays VMEM-resident across batch tiles (no re-DMA).
        # Buffered(1): skip the never-used second pipeline buffer (halves the
        # resident-weight footprint; matters on v7x's 64 MiB VMEM).
        if single_buffer:
            return pl.BlockSpec(arr.shape, lambda i: (0, 0),
                                pipeline_mode=pl.Buffered(1))
        return pl.BlockSpec(arr.shape, lambda i: (0, 0))

    def run(single_buffer, semantics):
        return pl.pallas_call(
            mlp_kernel,
            out_shape=out_shape,
            grid=(num_tiles,),
            in_specs=[
                # Last dim equals the full array dim (K) -> legal, and no pad DMA.
                pl.BlockSpec((TB, K), lambda i: (i, 0)),
                resident(w1, single_buffer), resident(b1, single_buffer),
                resident(w2, single_buffer), resident(b2, single_buffer),
                resident(w3, single_buffer), resident(b3, single_buffer),
            ],
            out_specs=pl.BlockSpec((TB, Np), lambda i: (i, 0)),
            compiler_params=pltpu.CompilerParams(
                dimension_semantics=semantics,
                vmem_limit_bytes=vmem_limit,
            ),
        )(xf, w1, b1, w2, b2, w3, b3)

    # v7x has 2 TensorCores: CORE_PARALLEL actually shards the batch grid across
    # them ("parallel" alone barely changes codegen).  v5e/v6e have 1 TC.
    kind = jax.devices()[0].device_kind.lower()
    is_v7 = ("v7" in kind) or ("7x" in kind)
    semantics_opts = ([(pltpu.CORE_PARALLEL,)] if is_v7 else []) + [("parallel",)]

    last_err = None
    for semantics in semantics_opts:
        for single_buffer in (True, False):
            try:
                out_p = jax.block_until_ready(run(single_buffer, semantics))
                return out_p[:B, :N]
            except Exception as err:
                # Optional hints (Buffered(1) / CORE_PARALLEL) unsupported on this
                # jax/Mosaic build or chip -> fall back to the plain pipelined path.
                last_err = err
    raise last_err


def reference_forward(x, p):
    h1 = jnp.maximum(x @ p["w1"] + p["b1"], 0.0)
    h2 = jnp.maximum(h1 @ p["w2"] + p["b2"], 0.0)
    return h2 @ p["w3"] + p["b3"]


if __name__ == "__main__":
    # Small shapes consistent with the module's forward: x is (batch, inputSize).
    batch, input_size, hidden_size, no_classes = 8, 64, 32, 10

    key = jax.random.PRNGKey(0)
    kx, kp, kx2 = jax.random.split(key, 3)
    params = init_params(kp, input_size, hidden_size, no_classes)
    padded = pad_params_for_tpu(params)

    # --- small batch: single-tile / no-grid path ---
    x = jax.random.normal(kx, (batch, input_size), dtype=jnp.float32)
    out = jax.block_until_ready(neural_net_forward(x, padded))
    ref = reference_forward(x, params)
    assert out.shape == (batch, no_classes)
    # bf16 MXU operands (f32 accumulation) -> loosened tolerance vs f32 reference.
    assert jnp.allclose(out, ref, atol=3e-2, rtol=3e-2), "mismatch vs reference (small batch)"

    # --- larger batch: batch-tiled grid path (balanced tiles, resident bf16 weights) ---
    big_batch = 2500
    x2 = jax.random.normal(kx2, (big_batch, input_size), dtype=jnp.float32)
    out2 = jax.block_until_ready(neural_net_forward(x2, padded))
    ref2 = reference_forward(x2, params)
    assert out2.shape == (big_batch, no_classes)
    assert jnp.allclose(out2, ref2, atol=3e-2, rtol=3e-2), "mismatch vs reference (tiled batch)"

    print("KERNEL_OK")
</pallas_src>

<mosaic_0001>
module attributes {stable_mosaic.version = 11 : i64} {
  func.func @mlp_kernel(%arg0: memref<8x64xf32, #tpu.memory_space<vmem>>, %arg1: memref<64x128xbf16, #tpu.memory_space<vmem>>, %arg2: memref<1x128xf32, #tpu.memory_space<vmem>>, %arg3: memref<128x128xbf16, #tpu.memory_space<vmem>>, %arg4: memref<1x128xf32, #tpu.memory_space<vmem>>, %arg5: memref<128x128xbf16, #tpu.memory_space<vmem>>, %arg6: memref<1x128xf32, #tpu.memory_space<vmem>>, %arg7: memref<8x128xf32, #tpu.memory_space<vmem>>) attributes {dimension_semantics = [], scalar_prefetch = 0 : i64, scratch_operands = 0 : i64, tpu.core_type = #tpu.core_type<tc>} {
    %c0 = arith.constant 0 : index
    %c0_0 = arith.constant 0 : index
    %0 = vector.load %arg0[%c0, %c0_0] : memref<8x64xf32, #tpu.memory_space<vmem>>, vector<8x64xf32>
    %1 = arith.truncf %0 : vector<8x64xf32> to vector<8x64xbf16>
    %c0_1 = arith.constant 0 : index
    %c0_2 = arith.constant 0 : index
    %2 = vector.load %arg1[%c0_1, %c0_2] : memref<64x128xbf16, #tpu.memory_space<vmem>>, vector<64x128xbf16>
    %cst = arith.constant dense<0.000000e+00> : vector<8x128xf32>
    %3 = tpu.matmul %1, %2, %cst {dimension_numbers = #tpu.dot_dimension_numbers<[1], [0], [0], [1], [0, 0, 1, 1], [], []>} : vector<8x64xbf16>, vector<64x128xbf16>, vector<8x128xf32> -> vector<8x128xf32>
    %c0_3 = arith.constant 0 : index
    %c0_4 = arith.constant 0 : index
    %4 = vector.load %arg2[%c0_3, %c0_4] : memref<1x128xf32, #tpu.memory_space<vmem>>, vector<1x128xf32>
    %5 = vector.broadcast %4 : vector<1x128xf32> to vector<8x128xf32>
    %6 = arith.addf %3, %5 : vector<8x128xf32>
    %cst_5 = arith.constant 0.000000e+00 : f32
    %7 = vector.broadcast %cst_5 : f32 to vector<8x128xf32>
    %8 = arith.maximumf %6, %7 : vector<8x128xf32>
    %9 = arith.truncf %8 : vector<8x128xf32> to vector<8x128xbf16>
    %c0_6 = arith.constant 0 : index
    %c0_7 = arith.constant 0 : index
    %10 = vector.load %arg3[%c0_6, %c0_7] : memref<128x128xbf16, #tpu.memory_space<vmem>>, vector<128x128xbf16>
    %cst_8 = arith.constant dense<0.000000e+00> : vector<8x128xf32>
    %11 = tpu.matmul %9, %10, %cst_8 {dimension_numbers = #tpu.dot_dimension_numbers<[1], [0], [0], [1], [0, 0, 1, 1], [], []>} : vector<8x128xbf16>, vector<128x128xbf16>, vector<8x128xf32> -> vector<8x128xf32>
    %c0_9 = arith.constant 0 : index
    %c0_10 = arith.constant 0 : index
    %12 = vector.load %arg4[%c0_9, %c0_10] : memref<1x128xf32, #tpu.memory_space<vmem>>, vector<1x128xf32>
    %13 = vector.broadcast %12 : vector<1x128xf32> to vector<8x128xf32>
    %14 = arith.addf %11, %13 : vector<8x128xf32>
    %cst_11 = arith.constant 0.000000e+00 : f32
    %15 = vector.broadcast %cst_11 : f32 to vector<8x128xf32>
    %16 = arith.maximumf %14, %15 : vector<8x128xf32>
    %17 = arith.truncf %16 : vector<8x128xf32> to vector<8x128xbf16>
    %c0_12 = arith.constant 0 : index
    %c0_13 = arith.constant 0 : index
    %18 = vector.load %arg5[%c0_12, %c0_13] : memref<128x128xbf16, #tpu.memory_space<vmem>>, vector<128x128xbf16>
    %cst_14 = arith.constant dense<0.000000e+00> : vector<8x128xf32>
    %19 = tpu.matmul %17, %18, %cst_14 {dimension_numbers = #tpu.dot_dimension_numbers<[1], [0], [0], [1], [0, 0, 1, 1], [], []>} : vector<8x128xbf16>, vector<128x128xbf16>, vector<8x128xf32> -> vector<8x128xf32>
    %c0_15 = arith.constant 0 : index
    %c0_16 = arith.constant 0 : index
    %20 = vector.load %arg6[%c0_15, %c0_16] : memref<1x128xf32, #tpu.memory_space<vmem>>, vector<1x128xf32>
    %21 = vector.broadcast %20 : vector<1x128xf32> to vector<8x128xf32>
    %22 = arith.addf %19, %21 : vector<8x128xf32>
    %c0_17 = arith.constant 0 : index
    %c0_18 = arith.constant 0 : index
    %23 = vector.load %arg7[%c0_17, %c0_18] : memref<8x128xf32, #tpu.memory_space<vmem>>, vector<8x128xf32>
    tpu.vector_store %arg7[%c0_17, %c0_18], %22 {strides = array<i32>} : memref<8x128xf32, #tpu.memory_space<vmem>>, vector<8x128xf32>,
    return
  }
}

</mosaic_0001>

<llo_original>
// kernel: tpu_custom_call.1
$region0: #{tpu_custom_call.1}
  #allocation0 [shape = 'u32[]', space=smem, size = 0x4, offset = 0x4, fixed_abs, tag = 'smem constant byte address 0x4 - core index']
  #allocation1 [shape = 'u32[144,128]{1,0:T(1,128)}', space=vmem, size = 0x12000, scoped, tag = 'internal scratch']
  %s0 = inlined_call_operand.hbm [shape: f32[8,64], index: 0, kind: input, shape index: {}]
  %s1 = inlined_call_operand.hbm [shape: bf16[64,128], index: 1, kind: input, shape index: {}]
  %s2 = inlined_call_operand.vmem [shape: f32[1,128], index: 2, kind: input, shape index: {}]
  %s3 = inlined_call_operand.hbm [shape: bf16[128,128], index: 3, kind: input, shape index: {}]
  %s4 = inlined_call_operand.vmem [shape: f32[1,128], index: 4, kind: input, shape index: {}]
  %s5 = inlined_call_operand.hbm [shape: bf16[128,128], index: 5, kind: input, shape index: {}]
  %s6 = inlined_call_operand.vmem [shape: f32[1,128], index: 6, kind: input, shape index: {}]
  %s7 = inlined_call_operand.hbm [shape: f32[8,128], index: 7, kind: output, shape index: {}]
  %s8 = sld [smem:[#allocation0]]
  $region54: #{tpu_custom_call.1} parent=0
    _
  %s10 = ssub.s32 1, %s8
  %s11 = scalar_select 0, %s10, %s8
  $region1: #{tpu_custom_call.1} parent=0
    #allocation2 [shape = 'u8[4096]{0}', space=vmem, size = 0x1000, scoped, tag = 'input window, operand 0, single buffered']
    #allocation3 [shape = 's32[1]{0}', space=sflag, size = 0x4, scoped, tag = 'scoped memory for tpu_custom_call.1']
    #allocation4 [shape = 's32[1]{0}', space=sflag, size = 0x4, scoped, tag = 'scoped memory for tpu_custom_call.1']
    #allocation5 [shape = 'u8[16384]{0}', space=vmem, size = 0x4000, scoped, tag = 'input window, operand 1, single buffered']
    #allocation6 [shape = 's32[1]{0}', space=sflag, size = 0x4, scoped, tag = 'scoped memory for tpu_custom_call.1']
    #allocation7 [shape = 'u8[32768]{0}', space=vmem, size = 0x8000, scoped, tag = 'input window, operand 3, single buffered']
    #allocation8 [shape = 'u8[32768]{0}', space=vmem, size = 0x8000, scoped, tag = 'input window, operand 5, single buffered']
    #allocation9 [shape = 's32[1]{0}', space=sflag, size = 0x4, scoped, tag = 'scoped memory for tpu_custom_call.1']
    #allocation10 [shape = 'u8[4096]{0}', space=vmem, size = 0x1000, scoped, tag = 'output window, operand 0, single buffered']
    %12 = vsyncpa [#allocation3], 0
    %13 = vsyncpa [#allocation6], 0
    %14 = vsyncpa [#allocation9], 0
    %15 = vsyncpa [#allocation4], 0
    // Predicated region
    $region2: #{tpu_custom_call.1} parent=1 // pred_check
      _
    $region3: #{tpu_custom_call.1} parent=1 // pred_check_branch
      %17 = sbr.rel (0) target = $region5
    $region4: #{tpu_custom_call.1} parent=1 // pred_region
      %s19 = ssub.s32 128, 128
      %20 = vsyncadd [#allocation3], %s19
      %s22 = sshll.u32 [#allocation2], 4
      %s23 = int_to_ptr.vmem [resolvable:$true] %s22
      %25 = dma.hbm_to_vmem [thread:$0]  %s0, 128, %s23, [#allocation3]
    $region5: #{tpu_custom_call.1} parent=1 // pred_fallthru
      _
    // Predicated region
    $region6: #{tpu_custom_call.1} parent=1 // pred_check
      _
    $region7: #{tpu_custom_call.1} parent=1 // pred_check_branch
      %27 = sbr.rel (0) target = $region9
    $region8: #{tpu_custom_call.1} parent=1 // pred_region
      %s29 = ssub.s32 512, 512
      %30 = vsyncadd [#allocation6], %s29
      %s31 = sshll.u32 [#allocation5], 4
      %s32 = int_to_ptr.vmem [resolvable:$true] %s31
      %37 = dma.hbm_to_vmem [thread:$0]  %s1, 512, %s32, [#allocation6], 64, 64, 4
    $region9: #{tpu_custom_call.1} parent=1 // pred_fallthru
      _
    // Predicated region
    $region10: #{tpu_custom_call.1} parent=1 // pred_check
      _
    $region11: #{tpu_custom_call.1} parent=1 // pred_check_branch
      %39 = sbr.rel (0) target = $region13
    $region12: #{tpu_custom_call.1} parent=1 // pred_region
      _
    $region13: #{tpu_custom_call.1} parent=1 // pred_fallthru
      _
    // Predicated region
    $region14: #{tpu_custom_call.1} parent=1 // pred_check
      _
    $region15: #{tpu_custom_call.1} parent=1 // pred_check_branch
      %41 = sbr.rel (0) target = $region17
    $region16: #{tpu_custom_call.1} parent=1 // pred_region
      %s43 = ssub.s32 1024, 1024
      %44 = vsyncadd [#allocation6], %s43
      %s45 = sshll.u32 [#allocation7], 4
      %s46 = int_to_ptr.vmem [resolvable:$true] %s45
      %51 = dma.hbm_to_vmem [thread:$0]  %s3, 1024, %s46, [#allocation6], 64, 64, 4
    $region17: #{tpu_custom_call.1} parent=1 // pred_fallthru
      _
    // Predicated region
    $region18: #{tpu_custom_call.1} parent=1 // pred_check
      _
    $region19: #{tpu_custom_call.1} parent=1 // pred_check_branch
      %53 = sbr.rel (0) target = $region21
    $region20: #{tpu_custom_call.1} parent=1 // pred_region
      _
    $region21: #{tpu_custom_call.1} parent=1 // pred_fallthru
      _
    // Predicated region
    $region22: #{tpu_custom_call.1} parent=1 // pred_check
      _
    $region23: #{tpu_custom_call.1} parent=1 // pred_check_branch
      %55 = sbr.rel (0) target = $region25
    $region24: #{tpu_custom_call.1} parent=1 // pred_region
      %s57 = ssub.s32 1024, 1024
      %58 = vsyncadd [#allocation9], %s57
      %s59 = sshll.u32 [#allocation8], 4
      %s60 = int_to_ptr.vmem [resolvable:$true] %s59
      %65 = dma.hbm_to_vmem [thread:$0]  %s5, 1024, %s60, [#allocation9], 64, 64, 4
    $region25: #{tpu_custom_call.1} parent=1 // pred_fallthru
      _
    // Predicated region
    $region26: #{tpu_custom_call.1} parent=1 // pred_check
      _
    $region27: #{tpu_custom_call.1} parent=1 // pred_check_branch
      %67 = sbr.rel (0) target = $region29
    $region28: #{tpu_custom_call.1} parent=1 // pred_region
      _
    $region29: #{tpu_custom_call.1} parent=1 // pred_fallthru
      _
    // Predicated region
    $region30: #{tpu_custom_call.1} parent=1 // pred_check
      _
    $region31: #{tpu_custom_call.1} parent=1 // pred_check_branch
      %69 = sbr.rel (0) target = $region33
    $region32: #{tpu_custom_call.1} parent=1 // pred_region
      %70 = dma.done [#allocation3], 128
    $region33: #{tpu_custom_call.1} parent=1 // pred_fallthru
      _
    // Predicated region
    $region34: #{tpu_custom_call.1} parent=1 // pred_check
      _
    $region35: #{tpu_custom_call.1} parent=1 // pred_check_branch
      %72 = sbr.rel (0) target = $region37
    $region36: #{tpu_custom_call.1} parent=1 // pred_region
      %73 = dma.done [#allocation6], 512
    $region37: #{tpu_custom_call.1} parent=1 // pred_fallthru
      _
    // Predicated region
    $region38: #{tpu_custom_call.1} parent=1 // pred_check
      _
    $region39: #{tpu_custom_call.1} parent=1 // pred_check_branch
      %75 = sbr.rel (0) target = $region41
    $region40: #{tpu_custom_call.1} parent=1 // pred_region
      %76 = dma.done [#allocation6], 1024
    $region41: #{tpu_custom_call.1} parent=1 // pred_fallthru
      _
    // Predicated region
    $region42: #{tpu_custom_call.1} parent=1 // pred_check
      _
    $region43: #{tpu_custom_call.1} parent=1 // pred_check_branch
      %78 = sbr.rel (0) target = $region45
    $region44: #{tpu_custom_call.1} parent=1 // pred_region
      %79 = dma.done [#allocation9], 1024
    $region45: #{tpu_custom_call.1} parent=1 // pred_fallthru
      _
    %v81 = vld [vmem:[#allocation2] sm:$0xff]
    %v82 = vpack.c.bf16 %v81, %v81
    %v83 = vld [vmem:[#allocation5] sm:$0xf]
    %v84 = vld [vmem:[#allocation5 + $0x4] sm:$0xf]
    %v85 = vld [vmem:[#allocation5 + $0x8] sm:$0xf]
    %v86 = vld [vmem:[#allocation5 + $0xc] sm:$0xf]
    %v87 = vld [vmem:[#allocation5 + $0x10] sm:$0xf]
    %v88 = vld [vmem:[#allocation5 + $0x14] sm:$0xf]
    %v89 = vld [vmem:[#allocation5 + $0x18] sm:$0xf]
    %v90 = vld [vmem:[#allocation5 + $0x1c] sm:$0xf]
    %v91 = vld [vmem:[%s2] sm:$0x1]
    %v93 = vlaneseq
    %v94 = vshrl.u32 %v93, 7
    %v95 = vsub.s32 0, %v94
    %v96 = vrot.slane %v91, %v95
    %v106 = vunpack.c.l.b16 %v83
    %v107 = vunpack.c.l.b16 %v84
    %v108 = vunpack.c.l.b16 %v85
    %v109 = vunpack.c.l.b16 %v86
    %v110 = vunpack.c.l.b16 %v87
    %v111 = vunpack.c.l.b16 %v88
    %v112 = vunpack.c.l.b16 %v89
    %v113 = vunpack.c.l.b16 %v90
    %v114 = vpack.c.b16 %v107, %v106
    %v115 = vpack.c.b16 %v109, %v108
    %v116 = vpack.c.b16 %v111, %v110
    %v117 = vpack.c.b16 %v113, %v112
    %vm122 = vcmask 523264
    %v124 = vsel %vm122, %v82, 0
    %126 = vmatprep.subr.bf16.mxu0 0
    %127 = vmatpush1.bf16.msra.mxu0 %v114
    %128 = vmatprep.subr.bf16.mxu0 0
    %129 = vmatpush1.bf16.msra.mxu0 %v115
    %130 = vmatprep.subr.bf16.mxu0 0
    %131 = vmatpush1.bf16.msra.mxu0 %v116
    %132 = vmatprep.subr.bf16.mxu0 0
    %133 = vmatpush1.bf16.msra.mxu0 %v117
    %134 = vmatprep.subr.bf16.mxu0 0
    %135 = vmatpush1.bf16.msra.mxu0 0
    %136 = vmatprep.subr.bf16.mxu0 0
    %137 = vmatpush1.bf16.msra.mxu0 0
    %138 = vmatprep.subr.bf16.mxu0 0
    %139 = vmatpush1.bf16.msra.mxu0 0
    %140 = vmatprep.subr.bf16.mxu0 0
    %141 = vmatpush1.bf16.msra.mxu0 0
    %142 = vmatprep.subr.bf16.mxu0 0
    %143 = vmatpush1.bf16.msra.mxu0 0
    %144 = vmatprep.subr.bf16.mxu0 0
    %145 = vmatpush1.bf16.msra.mxu0 0
    %146 = vmatprep.subr.bf16.mxu0 0
    %147 = vmatpush1.bf16.msra.mxu0 0
    %148 = vmatprep.subr.bf16.mxu0 0
    %149 = vmatpush1.bf16.msra.mxu0 0
    %150 = vmatprep.subr.bf16.mxu0 0
    %151 = vmatpush1.bf16.msra.mxu0 0
    %152 = vmatprep.subr.bf16.mxu0 0
    %153 = vmatpush1.bf16.msra.mxu0 0
    %154 = vmatprep.subr.bf16.mxu0 0
    %155 = vmatpush1.bf16.msra.mxu0 0
    %156 = vmatprep.subr.bf16.mxu0 0
    %157 = vmatpush1.bf16.msra.mxu0 0
    %158 = vmatprep.mubr.bf16.mxu0 0
    %159 = vmatmul.mubr.bf16.gmra.mrb[0].mxu0 %v124
    %v160 = vpop.f32.mrb[0].mxu0
    %v161 = vadd.f32 %v96, %v160
    %v162 = vpop.f32.mrb[0].mxu0
    %v163 = vpop.f32.mrb[0].mxu0
    %v164 = vpop.f32.mrb[0].mxu0
    %165 = vdwg.mxu0
    %v166 = vmax.f32 %v161, 0.0
    %v167 = vpack.c.bf16 %v166, %v166
    %v168 = vld [vmem:[#allocation7] sm:$0xf]
    %v169 = vld [vmem:[#allocation7 + $0x4] sm:$0xf]
    %v170 = vld [vmem:[#allocation7 + $0x8] sm:$0xf]
    %v171 = vld [vmem:[#allocation7 + $0xc] sm:$0xf]
    %v172 = vld [vmem:[#allocation7 + $0x10] sm:$0xf]
    %v173 = vld [vmem:[#allocation7 + $0x14] sm:$0xf]
    %v174 = vld [vmem:[#allocation7 + $0x18] sm:$0xf]
    %v175 = vld [vmem:[#allocation7 + $0x1c] sm:$0xf]
    %v176 = vld [vmem:[#allocation7 + $0x20] sm:$0xf]
    %v177 = vld [vmem:[#allocation7 + $0x24] sm:$0xf]
    %v178 = vld [vmem:[#allocation7 + $0x28] sm:$0xf]
    %v179 = vld [vmem:[#allocation7 + $0x2c] sm:$0xf]
    %v180 = vld [vmem:[#allocation7 + $0x30] sm:$0xf]
    %v181 = vld [vmem:[#allocation7 + $0x34] sm:$0xf]
    %v182 = vld [vmem:[#allocation7 + $0x38] sm:$0xf]
    %v183 = vld [vmem:[#allocation7 + $0x3c] sm:$0xf]
    %v184 = vld [vmem:[%s4] sm:$0x1]
    %v186 = vlaneseq
    %v187 = vshrl.u32 %v186, 7
    %v188 = vsub.s32 0, %v187
    %v189 = vrot.slane %v184, %v188
    %v207 = vunpack.c.l.b16 %v168
    %v208 = vunpack.c.l.b16 %v169
    %v209 = vunpack.c.l.b16 %v170
    %v210 = vunpack.c.l.b16 %v171
    %v211 = vunpack.c.l.b16 %v172
    %v212 = vunpack.c.l.b16 %v173
    %v213 = vunpack.c.l.b16 %v174
    %v214 = vunpack.c.l.b16 %v175
    %v215 = vunpack.c.l.b16 %v176
    %v216 = vunpack.c.l.b16 %v177
    %v217 = vunpack.c.l.b16 %v178
    %v218 = vunpack.c.l.b16 %v179
    %v219 = vunpack.c.l.b16 %v180
    %v220 = vunpack.c.l.b16 %v181
    %v221 = vunpack.c.l.b16 %v182
    %v222 = vunpack.c.l.b16 %v183
    %v223 = vpack.c.b16 %v208, %v207
    %v224 = vpack.c.b16 %v210, %v209
    %v225 = vpack.c.b16 %v212, %v211
    %v226 = vpack.c.b16 %v214, %v213
    %v227 = vpack.c.b16 %v216, %v215
    %v228 = vpack.c.b16 %v218, %v217
    %v229 = vpack.c.b16 %v220, %v219
    %v230 = vpack.c.b16 %v222, %v221
    %239 = vmatprep.subr.bf16.mxu0 0
    %240 = vmatpush1.bf16.msra.mxu0 %v223
    %241 = vmatprep.subr.bf16.mxu0 0
    %242 = vmatpush1.bf16.msra.mxu0 %v224
    %243 = vmatprep.subr.bf16.mxu0 0
    %244 = vmatpush1.bf16.msra.mxu0 %v225
    %245 = vmatprep.subr.bf16.mxu0 0
    %246 = vmatpush1.bf16.msra.mxu0 %v226
    %247 = vmatprep.subr.bf16.mxu0 0
    %248 = vmatpush1.bf16.msra.mxu0 %v227
    %249 = vmatprep.subr.bf16.mxu0 0
    %250 = vmatpush1.bf16.msra.mxu0 %v228
    %251 = vmatprep.subr.bf16.mxu0 0
    %252 = vmatpush1.bf16.msra.mxu0 %v229
    %253 = vmatprep.subr.bf16.mxu0 0
    %254 = vmatpush1.bf16.msra.mxu0 %v230
    %255 = vmatprep.subr.bf16.mxu0 0
    %256 = vmatpush1.bf16.msra.mxu0 0
    %257 = vmatprep.subr.bf16.mxu0 0
    %258 = vmatpush1.bf16.msra.mxu0 0
    %259 = vmatprep.subr.bf16.mxu0 0
    %260 = vmatpush1.bf16.msra.mxu0 0
    %261 = vmatprep.subr.bf16.mxu0 0
    %262 = vmatpush1.bf16.msra.mxu0 0
    %263 = vmatprep.subr.bf16.mxu0 0
    %264 = vmatpush1.bf16.msra.mxu0 0
    %265 = vmatprep.subr.bf16.mxu0 0
    %266 = vmatpush1.bf16.msra.mxu0 0
    %267 = vmatprep.subr.bf16.mxu0 0
    %268 = vmatpush1.bf16.msra.mxu0 0
    %269 = vmatprep.subr.bf16.mxu0 0
    %270 = vmatpush1.bf16.msra.mxu0 0
    %271 = vmatprep.mubr.bf16.mxu0 0
    %272 = vmatmul.mubr.bf16.gmra.mrb[0].mxu0 %v167
    %v273 = vpop.f32.mrb[0].mxu0
    %v274 = vadd.f32 %v189, %v273
    %v275 = vpop.f32.mrb[0].mxu0
    %v276 = vpop.f32.mrb[0].mxu0
    %v277 = vpop.f32.mrb[0].mxu0
    %278 = vdwg.mxu0
    %v279 = vmax.f32 %v274, 0.0
    %v280 = vpack.c.bf16 %v279, %v279
    %v281 = vld [vmem:[#allocation8] sm:$0xf]
    %v282 = vld [vmem:[#allocation8 + $0x4] sm:$0xf]
    %v283 = vld [vmem:[#allocation8 + $0x8] sm:$0xf]
    %v284 = vld [vmem:[#allocation8 + $0xc] sm:$0xf]
    %v285 = vld [vmem:[#allocation8 + $0x10] sm:$0xf]
    %v286 = vld [vmem:[#allocation8 + $0x14] sm:$0xf]
    %v287 = vld [vmem:[#allocation8 + $0x18] sm:$0xf]
    %v288 = vld [vmem:[#allocation8 + $0x1c] sm:$0xf]
    %v289 = vld [vmem:[#allocation8 + $0x20] sm:$0xf]
    %v290 = vld [vmem:[#allocation8 + $0x24] sm:$0xf]
    %v291 = vld [vmem:[#allocation8 + $0x28] sm:$0xf]
    %v292 = vld [vmem:[#allocation8 + $0x2c] sm:$0xf]
    %v293 = vld [vmem:[#allocation8 + $0x30] sm:$0xf]
    %v294 = vld [vmem:[#allocation8 + $0x34] sm:$0xf]
    %v295 = vld [vmem:[#allocation8 + $0x38] sm:$0xf]
    %v296 = vld [vmem:[#allocation8 + $0x3c] sm:$0xf]
    %v297 = vld [vmem:[%s6] sm:$0x1]
    %v299 = vlaneseq
    %v300 = vshrl.u32 %v299, 7
    %v301 = vsub.s32 0, %v300
    %v302 = vrot.slane %v297, %v301
    %v320 = vunpack.c.l.b16 %v281
    %v321 = vunpack.c.l.b16 %v282
    %v322 = vunpack.c.l.b16 %v283
    %v323 = vunpack.c.l.b16 %v284
    %v324 = vunpack.c.l.b16 %v285
    %v325 = vunpack.c.l.b16 %v286
    %v326 = vunpack.c.l.b16 %v287
    %v327 = vunpack.c.l.b16 %v288
    %v328 = vunpack.c.l.b16 %v289
    %v329 = vunpack.c.l.b16 %v290
    %v330 = vunpack.c.l.b16 %v291
    %v331 = vunpack.c.l.b16 %v292
    %v332 = vunpack.c.l.b16 %v293
    %v333 = vunpack.c.l.b16 %v294
    %v334 = vunpack.c.l.b16 %v295
    %v335 = vunpack.c.l.b16 %v296
    %v336 = vpack.c.b16 %v321, %v320
    %v337 = vpack.c.b16 %v323, %v322
    %v338 = vpack.c.b16 %v325, %v324
    %v339 = vpack.c.b16 %v327, %v326
    %v340 = vpack.c.b16 %v329, %v328
    %v341 = vpack.c.b16 %v331, %v330
    %v342 = vpack.c.b16 %v333, %v332
    %v343 = vpack.c.b16 %v335, %v334
    %352 = vmatprep.subr.bf16.mxu0 0
    %353 = vmatpush1.bf16.msra.mxu0 %v336
    %354 = vmatprep.subr.bf16.mxu0 0
    %355 = vmatpush1.bf16.msra.mxu0 %v337
    %356 = vmatprep.subr.bf16.mxu0 0
    %357 = vmatpush1.bf16.msra.mxu0 %v338
    %358 = vmatprep.subr.bf16.mxu0 0
    %359 = vmatpush1.bf16.msra.mxu0 %v339
    %360 = vmatprep.subr.bf16.mxu0 0
    %361 = vmatpush1.bf16.msra.mxu0 %v340
    %362 = vmatprep.subr.bf16.mxu0 0
    %363 = vmatpush1.bf16.msra.mxu0 %v341
    %364 = vmatprep.subr.bf16.mxu0 0
    %365 = vmatpush1.bf16.msra.mxu0 %v342
    %366 = vmatprep.subr.bf16.mxu0 0
    %367 = vmatpush1.bf16.msra.mxu0 %v343
    %368 = vmatprep.subr.bf16.mxu0 0
    %369 = vmatpush1.bf16.msra.mxu0 0
    %370 = vmatprep.subr.bf16.mxu0 0
    %371 = vmatpush1.bf16.msra.mxu0 0
    %372 = vmatprep.subr.bf16.mxu0 0
    %373 = vmatpush1.bf16.msra.mxu0 0
    %374 = vmatprep.subr.bf16.mxu0 0
    %375 = vmatpush1.bf16.msra.mxu0 0
    %376 = vmatprep.subr.bf16.mxu0 0
    %377 = vmatpush1.bf16.msra.mxu0 0
    %378 = vmatprep.subr.bf16.mxu0 0
    %379 = vmatpush1.bf16.msra.mxu0 0
    %380 = vmatprep.subr.bf16.mxu0 0
    %381 = vmatpush1.bf16.msra.mxu0 0
    %382 = vmatprep.subr.bf16.mxu0 0
    %383 = vmatpush1.bf16.msra.mxu0 0
    %384 = vmatprep.mubr.bf16.mxu0 0
    %385 = vmatmul.mubr.bf16.gmra.mrb[0].mxu0 %v280
    %v386 = vpop.f32.mrb[0].mxu0
    %v387 = vadd.f32 %v302, %v386
    %v388 = vpop.f32.mrb[0].mxu0
    %v389 = vpop.f32.mrb[0].mxu0
    %v390 = vpop.f32.mrb[0].mxu0
    %391 = vdwg.mxu0
    %392 = vst [vmem:[#allocation10] sm:$0xff] %v387
    // Predicated region
    $region46: #{tpu_custom_call.1} parent=1 // pred_check
      _
    $region47: #{tpu_custom_call.1} parent=1 // pred_check_branch
      %394 = sbr.rel (0) target = $region49
    $region48: #{tpu_custom_call.1} parent=1 // pred_region
      %s396 = ssub.s32 128, 128
      %397 = vsyncadd [#allocation4], %s396
      %s399 = sshll.u32 [#allocation10], 4
      %s400 = int_to_ptr.vmem [resolvable:$true] %s399
      %402 = dma.vmem_to_hbm [thread:$0]  %s400, 128, %s7, [#allocation4]
    $region49: #{tpu_custom_call.1} parent=1 // pred_fallthru
      _
    // Predicated region
    $region50: #{tpu_custom_call.1} parent=1 // pred_check
      _
    $region51: #{tpu_custom_call.1} parent=1 // pred_check_branch
      %404 = sbr.rel (0) target = $region53
    $region52: #{tpu_custom_call.1} parent=1 // pred_region
      %405 = dma.done [#allocation4], 128
    $region53: #{tpu_custom_call.1} parent=1 // pred_fallthru
      _
    %406 = vsyncpa [#allocation3], 1
    %407 = vsyncpa [#allocation6], 1
    %408 = vsyncpa [#allocation9], 1
    %409 = vsyncpa [#allocation4], 1

</llo_original>
